<compile_context>
chip_gen: v5e
topology: v5e:2x2
jax: 0.10.0
libtpu: 0.0.40
codegen_flags: <defaults>
</compile_context>

<pallas_src>
import functools

import jax
import jax.numpy as jnp
from jax.experimental import pallas as pl
from jax.experimental.pallas import tpu as pltpu

LANE = 128            # vreg lane width
SUBLANE = 8           # f32 sublane count
MAX_BATCH_TILE = 1024  # rows per grid step; sized for v7x's smaller VMEM


def _round_up(n: int, m: int) -> int:
    return ((n + m - 1) // m) * m


def _mlp_kernel(x_ref, w1_ref, b1_ref, w2_ref, b2_ref, o_ref):
    # First layer: (TB, in) @ (in, hid_pad) -> f32 accumulate on the MXU.
    h = jnp.dot(x_ref[...], w1_ref[...], preferred_element_type=jnp.float32)
    # Bias + ReLU in f32, lane-dense (hid_pad = 128k) vregs.
    h = jnp.maximum(h + b1_ref[...].astype(jnp.float32), 0.0)
    # Second layer against the lane-padded (hid_pad, out_pad) weight.
    y = jnp.dot(h.astype(w2_ref.dtype), w2_ref[...],
                preferred_element_type=jnp.float32)
    y = y + b2_ref[...].astype(jnp.float32)
    o_ref[...] = y.astype(o_ref.dtype)


def prepare_params(w1, b1, w2, b2):
    """Zero-pad hidden and output dims to lane-dense multiples of 128.

    w1: (in, hidden), b1: (hidden,) or (1, hidden)
    w2: (hidden, out), b2: (out,) or (1, out)
    Returns (w1p, b1p, w2p, b2p, true_output_size).
    """
    in_size, hidden = w1.shape
    _, out_size = w2.shape
    hid_pad = _round_up(max(hidden, LANE), LANE)
    out_pad = _round_up(max(out_size, LANE), LANE)

    w1p = jnp.zeros((in_size, hid_pad), w1.dtype).at[:, :hidden].set(w1)
    b1p = jnp.zeros((1, hid_pad), b1.dtype).at[:, :hidden].set(
        jnp.reshape(b1, (1, hidden)))
    # Padded hidden rows of w2 are zero, so the (ReLU'd zero) padded hidden
    # activations contribute nothing -> exact semantics.
    w2p = jnp.zeros((hid_pad, out_pad), w2.dtype).at[:hidden, :out_size].set(w2)
    b2p = jnp.zeros((1, out_pad), b2.dtype).at[:, :out_size].set(
        jnp.reshape(b2, (1, out_size)))
    return w1p, b1p, w2p, b2p, out_size


@functools.partial(jax.jit, static_argnames=("out_size",))
def linear_qnet_forward(x, w1p, b1p, w2p, b2p, out_size):
    """x: (B, in). Padded params from prepare_params. Returns (B, out_size)."""
    B, in_size = x.shape
    hid_pad = w1p.shape[1]
    out_pad = w2p.shape[1]

    # Batch tile: multiple of 8 sublanes, capped so double-buffered x/out tiles
    # stay tiny relative to v7x's ~32 MiB scoped VMEM
    # (TB=1024 f32: x tile 64 KiB + out tile 512 KiB, x2 for double buffering).
    block_b = min(MAX_BATCH_TILE, _round_up(max(B, 1), SUBLANE))
    b_pad = _round_up(B, block_b)
    x_pad = x if b_pad == B else jnp.pad(x, ((0, b_pad - B), (0, 0)))

    grid = (b_pad // block_b,)

    y_pad = pl.pallas_call(
        _mlp_kernel,
        out_shape=jax.ShapeDtypeStruct((b_pad, out_pad), x.dtype),
        grid=grid,
        in_specs=[
            # Streamed per batch tile.
            pl.BlockSpec((block_b, in_size), lambda i: (i, 0)),
            # Weights / biases: constant index_map -> DMA'd once, VMEM-resident.
            pl.BlockSpec((in_size, hid_pad), lambda i: (0, 0)),
            pl.BlockSpec((1, hid_pad), lambda i: (0, 0)),
            pl.BlockSpec((hid_pad, out_pad), lambda i: (0, 0)),
            pl.BlockSpec((1, out_pad), lambda i: (0, 0)),
        ],
        out_specs=pl.BlockSpec((block_b, out_pad), lambda i: (i, 0)),
        compiler_params=pltpu.CompilerParams(
            # Batch tiles are independent -> shard across v7x's 2 TensorCores.
            dimension_semantics=("parallel",),
        ),
    )(x_pad, w1p, b1p, w2p, b2p)

    return y_pad[:B, :out_size]


def init_params(key, input_size, hidden_size, output_size, dtype=jnp.float32):
    """Deterministic init mimicking nn.Linear's U(-1/sqrt(fan_in), 1/sqrt(fan_in)).
    Weights stored (in_features, out_features) == PyTorch weight transposed.
    Pass dtype=jnp.bfloat16 on v6e/v7x to halve HBM weight traffic (f32
    accumulation inside the kernel keeps accuracy)."""
    k1, k2, k3, k4 = jax.random.split(key, 4)
    bound1 = 1.0 / float(input_size) ** 0.5
    bound2 = 1.0 / float(hidden_size) ** 0.5
    w1 = jax.random.uniform(k1, (input_size, hidden_size), dtype, -bound1, bound1)
    b1 = jax.random.uniform(k2, (hidden_size,), dtype, -bound1, bound1)
    w2 = jax.random.uniform(k3, (hidden_size, output_size), dtype, -bound2, bound2)
    b2 = jax.random.uniform(k4, (output_size,), dtype, -bound2, bound2)
    return w1, b1, w2, b2


if __name__ == "__main__":
    # Module-consistent shapes: input=16, hidden=32, output=4.
    INPUT, HIDDEN, OUTPUT = 16, 32, 4

    key = jax.random.PRNGKey(0)
    kx, kx2, kp = jax.random.split(key, 3)
    w1, b1, w2, b2 = init_params(kp, INPUT, HIDDEN, OUTPUT)
    w1p, b1p, w2p, b2p, out_size = prepare_params(w1, b1, w2, b2)

    def ref_fwd(x):
        return jnp.maximum(x @ w1 + b1[None, :], 0.0) @ w2 + b2[None, :]

    # Tiny batch (B=2) — exercises the batch-padding path.
    x_small = jax.random.normal(kx, (2, INPUT), jnp.float32)
    y_small = jax.block_until_ready(
        linear_qnet_forward(x_small, w1p, b1p, w2p, b2p, out_size))
    assert y_small.shape == (2, OUTPUT)
    assert jnp.allclose(y_small, ref_fwd(x_small), atol=1e-5, rtol=1e-5)

    # Replay-buffer-sized batch — exercises the multi-tile pipelined grid.
    x_big = jax.random.normal(kx2, (2304, INPUT), jnp.float32)
    y_big = jax.block_until_ready(
        linear_qnet_forward(x_big, w1p, b1p, w2p, b2p, out_size))
    assert y_big.shape == (2304, OUTPUT)
    assert jnp.allclose(y_big, ref_fwd(x_big), atol=1e-4, rtol=1e-4)

    print("KERNEL_OK")
</pallas_src>

<mosaic_0001>
module attributes {stable_mosaic.version = 11 : i64} {
  func.func @_mlp_kernel(%arg0: i32, %arg1: memref<8x16xf32, #tpu.memory_space<vmem>>, %arg2: memref<16x128xf32, #tpu.memory_space<vmem>>, %arg3: memref<1x128xf32, #tpu.memory_space<vmem>>, %arg4: memref<128x128xf32, #tpu.memory_space<vmem>>, %arg5: memref<1x128xf32, #tpu.memory_space<vmem>>, %arg6: memref<8x128xf32, #tpu.memory_space<vmem>>) attributes {dimension_semantics = [#tpu.dimension_semantics<parallel>], iteration_bounds = array<i64: 1>, scalar_prefetch = 0 : i64, scratch_operands = 0 : i64, tpu.core_type = #tpu.core_type<tc>, window_params = [{transform_indices = @transform_0, window_bounds = array<i64: 8, 16>}, {pipeline_mode = #tpu.pipeline_mode<synchronous>, transform_indices = @transform_1, window_bounds = array<i64: 16, 128>}, {pipeline_mode = #tpu.pipeline_mode<synchronous>, transform_indices = @transform_2, window_bounds = array<i64: 1, 128>}, {pipeline_mode = #tpu.pipeline_mode<synchronous>, transform_indices = @transform_3, window_bounds = array<i64: 128, 128>}, {pipeline_mode = #tpu.pipeline_mode<synchronous>, transform_indices = @transform_4, window_bounds = array<i64: 1, 128>}, {transform_indices = @transform_5, window_bounds = array<i64: 8, 128>}]} {
    %c0 = arith.constant 0 : index
    %c0_0 = arith.constant 0 : index
    %0 = vector.load %arg1[%c0, %c0_0] : memref<8x16xf32, #tpu.memory_space<vmem>>, vector<8x16xf32>
    %c0_1 = arith.constant 0 : index
    %c0_2 = arith.constant 0 : index
    %1 = vector.load %arg2[%c0_1, %c0_2] : memref<16x128xf32, #tpu.memory_space<vmem>>, vector<16x128xf32>
    %cst = arith.constant dense<0.000000e+00> : vector<8x128xf32>
    %2 = tpu.matmul %0, %1, %cst {dimension_numbers = #tpu.dot_dimension_numbers<[1], [0], [0], [1], [0, 0, 1, 1], [], []>} : vector<8x16xf32>, vector<16x128xf32>, vector<8x128xf32> -> vector<8x128xf32>
    %c0_3 = arith.constant 0 : index
    %c0_4 = arith.constant 0 : index
    %3 = vector.load %arg3[%c0_3, %c0_4] : memref<1x128xf32, #tpu.memory_space<vmem>>, vector<1x128xf32>
    %4 = vector.broadcast %3 : vector<1x128xf32> to vector<8x128xf32>
    %5 = arith.addf %2, %4 : vector<8x128xf32>
    %cst_5 = arith.constant 0.000000e+00 : f32
    %6 = vector.broadcast %cst_5 : f32 to vector<8x128xf32>
    %7 = arith.maximumf %5, %6 : vector<8x128xf32>
    %c0_6 = arith.constant 0 : index
    %c0_7 = arith.constant 0 : index
    %8 = vector.load %arg4[%c0_6, %c0_7] : memref<128x128xf32, #tpu.memory_space<vmem>>, vector<128x128xf32>
    %cst_8 = arith.constant dense<0.000000e+00> : vector<8x128xf32>
    %9 = tpu.matmul %7, %8, %cst_8 {dimension_numbers = #tpu.dot_dimension_numbers<[1], [0], [0], [1], [0, 0, 1, 1], [], []>} : vector<8x128xf32>, vector<128x128xf32>, vector<8x128xf32> -> vector<8x128xf32>
    %c0_9 = arith.constant 0 : index
    %c0_10 = arith.constant 0 : index
    %10 = vector.load %arg5[%c0_9, %c0_10] : memref<1x128xf32, #tpu.memory_space<vmem>>, vector<1x128xf32>
    %11 = vector.broadcast %10 : vector<1x128xf32> to vector<8x128xf32>
    %12 = arith.addf %9, %11 : vector<8x128xf32>
    %c0_11 = arith.constant 0 : index
    %c0_12 = arith.constant 0 : index
    %13 = vector.load %arg6[%c0_11, %c0_12] : memref<8x128xf32, #tpu.memory_space<vmem>>, vector<8x128xf32>
    tpu.vector_store %arg6[%c0_11, %c0_12], %12 {strides = array<i32>} : memref<8x128xf32, #tpu.memory_space<vmem>>, vector<8x128xf32>,
    return
  }
  func.func @transform_0(%arg0: i32) -> (i32, i32) {
    %c0_i32 = arith.constant 0 : i32
    %c0_i32_0 = arith.constant 0 : i32
    return %arg0, %c0_i32 : i32, i32
  }
  func.func @transform_1(%arg0: i32) -> (i32, i32) {
    %c0_i32 = arith.constant 0 : i32
    %c0_i32_0 = arith.constant 0 : i32
    %c0_i32_1 = arith.constant 0 : i32
    return %c0_i32, %c0_i32_0 : i32, i32
  }
  func.func @transform_2(%arg0: i32) -> (i32, i32) {
    %c0_i32 = arith.constant 0 : i32
    %c0_i32_0 = arith.constant 0 : i32
    %c0_i32_1 = arith.constant 0 : i32
    return %c0_i32, %c0_i32_0 : i32, i32
  }
  func.func @transform_3(%arg0: i32) -> (i32, i32) {
    %c0_i32 = arith.constant 0 : i32
    %c0_i32_0 = arith.constant 0 : i32
    %c0_i32_1 = arith.constant 0 : i32
    return %c0_i32, %c0_i32_0 : i32, i32
  }
  func.func @transform_4(%arg0: i32) -> (i32, i32) {
    %c0_i32 = arith.constant 0 : i32
    %c0_i32_0 = arith.constant 0 : i32
    %c0_i32_1 = arith.constant 0 : i32
    return %c0_i32, %c0_i32_0 : i32, i32
  }
  func.func @transform_5(%arg0: i32) -> (i32, i32) {
    %c0_i32 = arith.constant 0 : i32
    %c0_i32_0 = arith.constant 0 : i32
    return %arg0, %c0_i32 : i32, i32
  }
}

</mosaic_0001>

<llo_original>
// kernel: linear_qnet_forward.1
$region0: #{linear_qnet_forward.1}
  #allocation0 [shape = 'u32[]', space=smem, size = 0x4, offset = 0x4, fixed_abs, tag = 'smem constant byte address 0x4 - core index']
  #allocation1 [shape = 'u32[72,128]{1,0:T(1,128)}', space=vmem, size = 0x9000, scoped, tag = 'internal scratch']
  %s0 = inlined_call_operand.vmem [shape: f32[8,16], index: 0, kind: input, shape index: {}]
  %s1 = inlined_call_operand.hbm [shape: f32[16,128], index: 1, kind: input, shape index: {}]
  %s2 = inlined_call_operand.vmem [shape: f32[1,128], index: 2, kind: input, shape index: {}]
  %s3 = inlined_call_operand.hbm [shape: f32[128,128], index: 3, kind: input, shape index: {}]
  %s4 = inlined_call_operand.vmem [shape: f32[1,128], index: 4, kind: input, shape index: {}]
  %s5 = inlined_call_operand.vmem [shape: f32[8,128], index: 5, kind: output, shape index: {}]
  %s6 = sld [smem:[#allocation0]]
  $region38: #{linear_qnet_forward.1} parent=0
    _
  %s8 = ssub.s32 1, %s6
  %s9 = scalar_select 0, %s8, %s6
  $region1: #{linear_qnet_forward.1} parent=0
    #allocation2 [shape = 'u8[8192]{0}', space=vmem, size = 0x2000, scoped, tag = 'input window, operand 1, single buffered']
    #allocation3 [shape = 's32[1]{0}', space=sflag, size = 0x4, scoped, tag = 'scoped memory for linear_qnet_forward.1']
    #allocation4 [shape = 'u8[65536]{0}', space=vmem, size = 0x10000, scoped, tag = 'input window, operand 3, single buffered']
    #allocation5 [shape = 's32[1]{0}', space=sflag, size = 0x4, scoped, tag = 'scoped memory for linear_qnet_forward.1']
    %10 = vsyncpa [#allocation3], 0
    %11 = vsyncpa [#allocation5], 0
    // Predicated region
    $region2: #{linear_qnet_forward.1} parent=1 // pred_check
      _
    $region3: #{linear_qnet_forward.1} parent=1 // pred_check_branch
      %13 = sbr.rel (0) target = $region5
    $region4: #{linear_qnet_forward.1} parent=1 // pred_region
      _
    $region5: #{linear_qnet_forward.1} parent=1 // pred_fallthru
      _
    // Predicated region
    $region6: #{linear_qnet_forward.1} parent=1 // pred_check
      _
    $region7: #{linear_qnet_forward.1} parent=1 // pred_check_branch
      %15 = sbr.rel (0) target = $region9
    $region8: #{linear_qnet_forward.1} parent=1 // pred_region
      %17 = vsyncadd [#allocation3], 0
      %s18 = sshll.u32 %s1, 4
      %s19 = int_to_ptr.hbm [resolvable:$true] %s18
      %s20 = sshll.u32 [#allocation2], 4
      %s21 = int_to_ptr.vmem [resolvable:$true] %s20
      %26 = dma.hbm_to_vmem [thread:$0]  %s19, 256, %s21, [#allocation3], 128, 128, 8
    $region9: #{linear_qnet_forward.1} parent=1 // pred_fallthru
      _
    // Predicated region
    $region10: #{linear_qnet_forward.1} parent=1 // pred_check
      _
    $region11: #{linear_qnet_forward.1} parent=1 // pred_check_branch
      %28 = sbr.rel (0) target = $region13
    $region12: #{linear_qnet_forward.1} parent=1 // pred_region
      _
    $region13: #{linear_qnet_forward.1} parent=1 // pred_fallthru
      _
    // Predicated region
    $region14: #{linear_qnet_forward.1} parent=1 // pred_check
      _
    $region15: #{linear_qnet_forward.1} parent=1 // pred_check_branch
      %30 = sbr.rel (0) target = $region17
    $region16: #{linear_qnet_forward.1} parent=1 // pred_region
      %32 = vsyncadd [#allocation5], 0
      %s33 = sshll.u32 %s3, 4
      %s34 = int_to_ptr.hbm [resolvable:$true] %s33
      %s35 = sshll.u32 [#allocation4], 4
      %s36 = int_to_ptr.vmem [resolvable:$true] %s35
      %41 = dma.hbm_to_vmem [thread:$0]  %s34, 2048, %s36, [#allocation5], 128, 128, 8
    $region17: #{linear_qnet_forward.1} parent=1 // pred_fallthru
      _
    // Predicated region
    $region18: #{linear_qnet_forward.1} parent=1 // pred_check
      _
    $region19: #{linear_qnet_forward.1} parent=1 // pred_check_branch
      %43 = sbr.rel (0) target = $region21
    $region20: #{linear_qnet_forward.1} parent=1 // pred_region
      _
    $region21: #{linear_qnet_forward.1} parent=1 // pred_fallthru
      _
    // Predicated region
    $region22: #{linear_qnet_forward.1} parent=1 // pred_check
      _
    $region23: #{linear_qnet_forward.1} parent=1 // pred_check_branch
      %45 = sbr.rel (0) target = $region25
    $region24: #{linear_qnet_forward.1} parent=1 // pred_region
      %47 = dma.done [#allocation3], 256
    $region25: #{linear_qnet_forward.1} parent=1 // pred_fallthru
      _
    // Predicated region
    $region26: #{linear_qnet_forward.1} parent=1 // pred_check
      _
    $region27: #{linear_qnet_forward.1} parent=1 // pred_check_branch
      %49 = sbr.rel (0) target = $region29
    $region28: #{linear_qnet_forward.1} parent=1 // pred_region
      %51 = dma.done [#allocation5], 2048
    $region29: #{linear_qnet_forward.1} parent=1 // pred_fallthru
      _
    %v52 = vld [vmem:[%s0] sm:$0xff]
    %v53 = vld [vmem:[#allocation2] sm:$0xff]
    %v54 = vld [vmem:[#allocation2 + $0x8] sm:$0xff]
    %v55 = vld [vmem:[%s2] sm:$0x1]
    %v57 = vperm.slane %v55, 0
    %vm59 = vcmask 130048
    %v61 = vsel %vm59, %v52, 0
    %63 = vmatpush.msra.mxu0 0.0
    %64 = vmatpush.msra.mxu0 0.0
    %65 = vmatpush.msra.mxu0 0.0
    %66 = vmatpush.msra.mxu0 0.0
    %67 = vmatpush.msra.mxu0 0.0
    %68 = vmatpush.msra.mxu0 0.0
    %69 = vmatpush.msra.mxu0 0.0
    %70 = vmatpush.msra.mxu0 0.0
    %71 = vmatpush.msra.mxu0 0.0
    %72 = vmatpush.msra.mxu0 0.0
    %73 = vmatpush.msra.mxu0 0.0
    %74 = vmatpush.msra.mxu0 0.0
    %75 = vmatpush.msra.mxu0 0.0
    %76 = vmatpush.msra.mxu0 0.0
    %77 = vmatpush.msra.mxu0 %v54
    %78 = vmatpush.msra.mxu0 %v53
    %79 = vmatmul.f32.gmra.mxu0 %v61
    %v80 = vpop.f32.mrf.mxu0
    %v81 = vadd.f32 %v57, %v80
    %82 = vdwg.mxu0
    %v83 = vmax.f32 %v81, 0.0
    %v84 = vld [vmem:[#allocation4] sm:$0xff]
    %v85 = vld [vmem:[#allocation4 + $0x8] sm:$0xff]
    %v86 = vld [vmem:[#allocation4 + $0x10] sm:$0xff]
    %v87 = vld [vmem:[#allocation4 + $0x18] sm:$0xff]
    %v88 = vld [vmem:[#allocation4 + $0x20] sm:$0xff]
    %v89 = vld [vmem:[#allocation4 + $0x28] sm:$0xff]
    %v90 = vld [vmem:[#allocation4 + $0x30] sm:$0xff]
    %v91 = vld [vmem:[#allocation4 + $0x38] sm:$0xff]
    %v92 = vld [vmem:[#allocation4 + $0x40] sm:$0xff]
    %v93 = vld [vmem:[#allocation4 + $0x48] sm:$0xff]
    %v94 = vld [vmem:[#allocation4 + $0x50] sm:$0xff]
    %v95 = vld [vmem:[#allocation4 + $0x58] sm:$0xff]
    %v96 = vld [vmem:[#allocation4 + $0x60] sm:$0xff]
    %v97 = vld [vmem:[#allocation4 + $0x68] sm:$0xff]
    %v98 = vld [vmem:[#allocation4 + $0x70] sm:$0xff]
    %v99 = vld [vmem:[#allocation4 + $0x78] sm:$0xff]
    %v100 = vld [vmem:[%s4] sm:$0x1]
    %v102 = vperm.slane %v100, 0
    %104 = vmatpush.msra.mxu0 %v99
    %105 = vmatpush.msra.mxu0 %v98
    %106 = vmatpush.msra.mxu0 %v97
    %107 = vmatpush.msra.mxu0 %v96
    %108 = vmatpush.msra.mxu0 %v95
    %109 = vmatpush.msra.mxu0 %v94
    %110 = vmatpush.msra.mxu0 %v93
    %111 = vmatpush.msra.mxu0 %v92
    %112 = vmatpush.msra.mxu0 %v91
    %113 = vmatpush.msra.mxu0 %v90
    %114 = vmatpush.msra.mxu0 %v89
    %115 = vmatpush.msra.mxu0 %v88
    %116 = vmatpush.msra.mxu0 %v87
    %117 = vmatpush.msra.mxu0 %v86
    %118 = vmatpush.msra.mxu0 %v85
    %119 = vmatpush.msra.mxu0 %v84
    %120 = vmatmul.f32.gmra.mxu0 %v83
    %v121 = vpop.f32.mrf.mxu0
    %v122 = vadd.f32 %v102, %v121
    %123 = vdwg.mxu0
    %124 = vst [vmem:[%s5] sm:$0xff] %v122
    // Predicated region
    $region30: #{linear_qnet_forward.1} parent=1 // pred_check
      _
    $region31: #{linear_qnet_forward.1} parent=1 // pred_check_branch
      %126 = sbr.rel (0) target = $region33
    $region32: #{linear_qnet_forward.1} parent=1 // pred_region
      _
    $region33: #{linear_qnet_forward.1} parent=1 // pred_fallthru
      _
    // Predicated region
    $region34: #{linear_qnet_forward.1} parent=1 // pred_check
      _
    $region35: #{linear_qnet_forward.1} parent=1 // pred_check_branch
      %128 = sbr.rel (0) target = $region37
    $region36: #{linear_qnet_forward.1} parent=1 // pred_region
      _
    $region37: #{linear_qnet_forward.1} parent=1 // pred_fallthru
      _
    %129 = vsyncpa [#allocation3], 1
    %130 = vsyncpa [#allocation5], 1

</llo_original>
